<compile_context>
chip_gen: v5e
topology: v5e:2x2
jax: 0.10.0
libtpu: 0.0.40
codegen_flags: <defaults>
</compile_context>

<pallas_src>
import functools

import jax
import jax.numpy as jnp
from jax.experimental import pallas as pl
from jax.experimental.pallas import tpu as pltpu


_VMEM_PLAN_BUDGET = 24 * 1024 * 1024   # conservative planning budget (all generations)
_VMEM_LIMIT_BYTES = 32 * 1024 * 1024   # scoped-VMEM limit handed to Mosaic


def _round_up(x: int, m: int) -> int:
    return ((x + m - 1) // m) * m


# --------------------------------------------------------------------------- kernels

def _resident_kernel(x_ref, w_ref, b_ref, o_ref):
    """Full-K, weight-resident: one MXU matmul per batch tile, bias fused."""
    o_ref[...] = (
        jnp.dot(x_ref[...], w_ref[...], preferred_element_type=jnp.float32)
        + b_ref[...]
    ).astype(o_ref.dtype)


def _tiled_kernel(x_ref, w_ref, b_ref, o_ref, acc_ref):
    """General fallback: (B, C, K) grid, K innermost, f32 VMEM accumulator."""
    k = pl.program_id(2)

    @pl.when(k == 0)
    def _():
        acc_ref[...] = jnp.zeros_like(acc_ref)

    acc_ref[...] += jnp.dot(x_ref[...], w_ref[...], preferred_element_type=jnp.float32)

    @pl.when(k == pl.num_programs(2) - 1)
    def _():
        o_ref[...] = (acc_ref[...] + b_ref[...]).astype(o_ref.dtype)


# --------------------------------------------------------------------------- wrapper

def softmax_classifier_forward(feature, weight, bias, *, tm=512, mxu_dtype=None,
                               force_tiled=False):
    """feature: (B, F); weight: (C, F) (PyTorch nn.Linear layout); bias: (C,)."""
    B, F = feature.shape
    C, Fw = weight.shape
    assert F == Fw and bias.shape == (C,)

    out_dtype = feature.dtype
    out_bytes = jnp.dtype(out_dtype).itemsize

    # ---- static-parameter prep (per call here; cache once per module in practice) ----
    # Transpose to (F, C) so the kernel runs a plain MXU contraction (no trans_b),
    # pad classes to a lane multiple for dense vst stores, keep bias in f32.
    Cp = _round_up(C, 128)
    w_t = weight.T                                    # (F, C)
    b2 = bias.astype(jnp.float32).reshape(1, C)
    if Cp != C:
        w_t = jnp.pad(w_t, ((0, 0), (0, Cp - C)))
        b2 = jnp.pad(b2, ((0, 0), (0, Cp - C)))

    x = feature
    if mxu_dtype is not None:
        # Cast in the wrapper, not in-kernel: halves DMA bytes, frees VPU slots.
        x = x.astype(mxu_dtype)
        w_t = w_t.astype(mxu_dtype)
    in_bytes = jnp.dtype(x.dtype).itemsize

    cost = pl.CostEstimate(
        flops=2 * B * F * C,
        transcendentals=0,
        bytes_accessed=B * F * in_bytes + F * Cp * in_bytes + Cp * 4 + B * Cp * out_bytes,
    )

    # ---- batch tile selection ----
    tm = min(tm, B)
    if tm < B and tm % 8:
        tm = _round_up(tm, 8)
    # Keep >= 2 batch grid steps when possible so both v7x TensorCores get work.
    if B >= 16 and pl.cdiv(B, tm) < 2:
        tm = _round_up(pl.cdiv(B, 2), 8)

    # ---- weight-resident / full-K plan (primary path for classifier-sized heads) ----
    def _resident_bytes(tm_):
        return (F * Cp * in_bytes            # resident weight
                + 2 * tm_ * F * in_bytes     # double-buffered activation tiles
                + 2 * tm_ * Cp * out_bytes   # double-buffered output tiles
                + Cp * 4)                    # bias

    tm_res = tm
    use_resident = not force_tiled
    if use_resident:
        while tm_res > 8 and _resident_bytes(tm_res) > _VMEM_PLAN_BUDGET:
            tm_res = max(8, _round_up(tm_res // 2, 8))
        use_resident = _resident_bytes(tm_res) <= _VMEM_PLAN_BUDGET

    if use_resident:
        grid = (pl.cdiv(B, tm_res),)
        out = pl.pallas_call(
            _resident_kernel,
            out_shape=jax.ShapeDtypeStruct((B, Cp), out_dtype),
            grid_spec=pltpu.PrefetchScalarGridSpec(
                num_scalar_prefetch=0,
                grid=grid,
                in_specs=[
                    pl.BlockSpec((tm_res, F), lambda i: (i, 0)),   # activations (ragged edge ok)
                    pl.BlockSpec((F, Cp), lambda i: (0, 0)),       # weight: constant -> resident
                    pl.BlockSpec((1, Cp), lambda i: (0, 0)),       # bias
                ],
                out_specs=pl.BlockSpec((tm_res, Cp), lambda i: (i, 0)),
            ),
            compiler_params=pltpu.CompilerParams(
                dimension_semantics=("parallel",),
                vmem_limit_bytes=_VMEM_LIMIT_BYTES,
            ),
            cost_estimate=cost,
        )(x, w_t, b2)
    else:
        # ---- general tiled fallback (weight too big to stay resident) ----
        tn = min(512, Cp)
        tk = min(2048, _round_up(F, 128))
        tm_ = tm

        def _tiled_bytes(tm__, tn__, tk__):
            return (2 * tm__ * tk__ * in_bytes + 2 * tk__ * tn__ * in_bytes
                    + 2 * tm__ * tn__ * out_bytes + tm__ * tn__ * 4 + 2 * tn__ * 4)

        while _tiled_bytes(tm_, tn, tk) > _VMEM_PLAN_BUDGET and tk > 256:
            tk = max(256, tk // 2)
        while _tiled_bytes(tm_, tn, tk) > _VMEM_PLAN_BUDGET and tn > 256:
            tn = max(256, tn // 2)
        while _tiled_bytes(tm_, tn, tk) > _VMEM_PLAN_BUDGET and tm_ > 64:
            tm_ = max(64, _round_up(tm_ // 2, 8))

        # Zero-padding the contraction axis is load-bearing for correctness here.
        Fp = _round_up(F, tk)
        Cpp = _round_up(Cp, tn)
        xp = jnp.pad(x, ((0, 0), (0, Fp - F))) if Fp != F else x
        wp = w_t
        if (Fp, Cpp) != (F, Cp):
            wp = jnp.pad(w_t, ((0, Fp - F), (0, Cpp - Cp)))
        bp = jnp.pad(b2, ((0, 0), (0, Cpp - Cp))) if Cpp != Cp else b2

        grid = (pl.cdiv(B, tm_), Cpp // tn, Fp // tk)
        out = pl.pallas_call(
            _tiled_kernel,
            out_shape=jax.ShapeDtypeStruct((B, Cpp), out_dtype),
            grid_spec=pltpu.PrefetchScalarGridSpec(
                num_scalar_prefetch=0,
                grid=grid,
                in_specs=[
                    pl.BlockSpec((tm_, tk), lambda i, j, k: (i, k)),   # activations
                    pl.BlockSpec((tk, tn), lambda i, j, k: (k, j)),    # weight (batch-indep)
                    pl.BlockSpec((1, tn), lambda i, j, k: (0, j)),     # bias
                ],
                out_specs=pl.BlockSpec((tm_, tn), lambda i, j, k: (i, j)),
                scratch_shapes=[pltpu.VMEM((tm_, tn), jnp.float32)],
            ),
            compiler_params=pltpu.CompilerParams(
                dimension_semantics=("parallel", "parallel", "arbitrary"),
                vmem_limit_bytes=_VMEM_LIMIT_BYTES,
            ),
            cost_estimate=cost,
        )(xp, wp, bp)
        Cp = Cpp

    if Cp != C:
        out = out[:, :C]
    return out


# --------------------------------------------------------------------------- demo / test

if __name__ == "__main__":
    # Small shapes consistent with the module: batch=8, feature_dim=32, class_num=16.
    B, FEATURE_DIM, CLASS_NUM = 8, 32, 16

    key = jax.random.PRNGKey(0)
    k_x, k_w, k_b = jax.random.split(key, 3)

    bound = 1.0 / (FEATURE_DIM ** 0.5)
    feature = jax.random.normal(k_x, (B, FEATURE_DIM), dtype=jnp.float32)
    weight = jax.random.uniform(
        k_w, (CLASS_NUM, FEATURE_DIM), minval=-bound, maxval=bound, dtype=jnp.float32
    )
    bias = jax.random.uniform(
        k_b, (CLASS_NUM,), minval=-bound, maxval=bound, dtype=jnp.float32
    )

    out = jax.block_until_ready(softmax_classifier_forward(feature, weight, bias))
    ref = feature @ weight.T + bias
    assert out.shape == (B, CLASS_NUM)
    assert jnp.allclose(out, ref, atol=1e-4, rtol=1e-4)

    # Medium size: multi-batch-tile weight-resident path (2 grid steps).
    B2, F2, C2 = 512, 640, 384
    k_x2, k_w2, k_b2 = jax.random.split(jax.random.PRNGKey(0), 3)
    bound2 = 1.0 / (F2 ** 0.5)
    x2 = jax.random.normal(k_x2, (B2, F2), dtype=jnp.float32)
    w2 = jax.random.uniform(k_w2, (C2, F2), minval=-bound2, maxval=bound2, dtype=jnp.float32)
    bv2 = jax.random.uniform(k_b2, (C2,), minval=-bound2, maxval=bound2, dtype=jnp.float32)
    ref2 = jnp.dot(x2, w2.T, precision=jax.lax.Precision.HIGHEST) + bv2

    out2 = jax.block_until_ready(softmax_classifier_forward(x2, w2, bv2))
    assert out2.shape == (B2, C2)
    assert jnp.allclose(out2, ref2, atol=2e-2, rtol=2e-2)

    # bf16-MXU-input path (wrapper-side cast, f32 accumulation) -- looser tolerance.
    out_bf16 = jax.block_until_ready(
        softmax_classifier_forward(x2, w2, bv2, mxu_dtype=jnp.bfloat16)
    )
    assert jnp.allclose(out_bf16, ref2, atol=5e-2, rtol=5e-2)

    # Exercise the general tiled fallback (accumulator + K-grid) path too.
    out_tiled = jax.block_until_ready(
        softmax_classifier_forward(x2, w2, bv2, force_tiled=True)
    )
    assert jnp.allclose(out_tiled, ref2, atol=2e-2, rtol=2e-2)

    print("KERNEL_OK")
</pallas_src>

<mosaic_0001>
module attributes {stable_mosaic.version = 11 : i64} {
  func.func @_resident_kernel(%arg0: i32, %arg1: memref<8x32xf32, #tpu.memory_space<vmem>>, %arg2: memref<32x128xf32, #tpu.memory_space<vmem>>, %arg3: memref<1x128xf32, #tpu.memory_space<vmem>>, %arg4: memref<8x128xf32, #tpu.memory_space<vmem>>) attributes {dimension_semantics = [#tpu.dimension_semantics<parallel>], iteration_bounds = array<i64: 1>, scalar_prefetch = 0 : i64, scratch_operands = 0 : i64, tpu.core_type = #tpu.core_type<tc>, window_params = [{transform_indices = @transform_0, window_bounds = array<i64: 8, 32>}, {pipeline_mode = #tpu.pipeline_mode<synchronous>, transform_indices = @transform_1, window_bounds = array<i64: 32, 128>}, {pipeline_mode = #tpu.pipeline_mode<synchronous>, transform_indices = @transform_2, window_bounds = array<i64: 1, 128>}, {transform_indices = @transform_3, window_bounds = array<i64: 8, 128>}]} {
    %c0 = arith.constant 0 : index
    %c0_0 = arith.constant 0 : index
    %0 = vector.load %arg1[%c0, %c0_0] : memref<8x32xf32, #tpu.memory_space<vmem>>, vector<8x32xf32>
    %c0_1 = arith.constant 0 : index
    %c0_2 = arith.constant 0 : index
    %1 = vector.load %arg2[%c0_1, %c0_2] : memref<32x128xf32, #tpu.memory_space<vmem>>, vector<32x128xf32>
    %cst = arith.constant dense<0.000000e+00> : vector<8x128xf32>
    %2 = tpu.matmul %0, %1, %cst {dimension_numbers = #tpu.dot_dimension_numbers<[1], [0], [0], [1], [0, 0, 1, 1], [], []>} : vector<8x32xf32>, vector<32x128xf32>, vector<8x128xf32> -> vector<8x128xf32>
    %c0_3 = arith.constant 0 : index
    %c0_4 = arith.constant 0 : index
    %3 = vector.load %arg3[%c0_3, %c0_4] : memref<1x128xf32, #tpu.memory_space<vmem>>, vector<1x128xf32>
    %4 = vector.broadcast %3 : vector<1x128xf32> to vector<8x128xf32>
    %5 = arith.addf %2, %4 : vector<8x128xf32>
    %c0_5 = arith.constant 0 : index
    %c0_6 = arith.constant 0 : index
    %6 = vector.load %arg4[%c0_5, %c0_6] : memref<8x128xf32, #tpu.memory_space<vmem>>, vector<8x128xf32>
    tpu.vector_store %arg4[%c0_5, %c0_6], %5 {strides = array<i32>} : memref<8x128xf32, #tpu.memory_space<vmem>>, vector<8x128xf32>,
    return
  }
  func.func @transform_0(%arg0: i32) -> (i32, i32) {
    %c0_i32 = arith.constant 0 : i32
    %c0_i32_0 = arith.constant 0 : i32
    return %arg0, %c0_i32 : i32, i32
  }
  func.func @transform_1(%arg0: i32) -> (i32, i32) {
    %c0_i32 = arith.constant 0 : i32
    %c0_i32_0 = arith.constant 0 : i32
    %c0_i32_1 = arith.constant 0 : i32
    return %c0_i32, %c0_i32_0 : i32, i32
  }
  func.func @transform_2(%arg0: i32) -> (i32, i32) {
    %c0_i32 = arith.constant 0 : i32
    %c0_i32_0 = arith.constant 0 : i32
    %c0_i32_1 = arith.constant 0 : i32
    return %c0_i32, %c0_i32_0 : i32, i32
  }
  func.func @transform_3(%arg0: i32) -> (i32, i32) {
    %c0_i32 = arith.constant 0 : i32
    %c0_i32_0 = arith.constant 0 : i32
    return %arg0, %c0_i32 : i32, i32
  }
}

</mosaic_0001>

<llo_original>
// kernel: tpu_custom_call.1
$region0: #{tpu_custom_call.1}
  #allocation0 [shape = 'u32[]', space=smem, size = 0x4, offset = 0x4, fixed_abs, tag = 'smem constant byte address 0x4 - core index']
  #allocation1 [shape = 'u32[72,128]{1,0:T(1,128)}', space=vmem, size = 0x9000, scoped, tag = 'internal scratch']
  %s0 = inlined_call_operand.hbm [shape: f32[8,32], index: 0, kind: input, shape index: {}]
  %s1 = inlined_call_operand.hbm [shape: f32[32,128], index: 1, kind: input, shape index: {}]
  %s2 = inlined_call_operand.vmem [shape: f32[1,128], index: 2, kind: input, shape index: {}]
  %s3 = inlined_call_operand.hbm [shape: f32[8,128], index: 3, kind: output, shape index: {}]
  %s4 = sld [smem:[#allocation0]]
  $region30: #{tpu_custom_call.1} parent=0
    _
  %s6 = ssub.s32 1, %s4
  %s7 = scalar_select 0, %s6, %s4
  $region1: #{tpu_custom_call.1} parent=0
    #allocation2 [shape = 'u8[4096]{0}', space=vmem, size = 0x1000, scoped, tag = 'input window, operand 0, single buffered']
    #allocation3 [shape = 's32[1]{0}', space=sflag, size = 0x4, scoped, tag = 'scoped memory for tpu_custom_call.1']
    #allocation4 [shape = 's32[1]{0}', space=sflag, size = 0x4, scoped, tag = 'scoped memory for tpu_custom_call.1']
    #allocation5 [shape = 'u8[16384]{0}', space=vmem, size = 0x4000, scoped, tag = 'input window, operand 1, single buffered']
    #allocation6 [shape = 's32[1]{0}', space=sflag, size = 0x4, scoped, tag = 'scoped memory for tpu_custom_call.1']
    #allocation7 [shape = 'u8[4096]{0}', space=vmem, size = 0x1000, scoped, tag = 'output window, operand 0, single buffered']
    %8 = vsyncpa [#allocation3], 0
    %9 = vsyncpa [#allocation6], 0
    %10 = vsyncpa [#allocation4], 0
    // Predicated region
    $region2: #{tpu_custom_call.1} parent=1 // pred_check
      _
    $region3: #{tpu_custom_call.1} parent=1 // pred_check_branch
      %12 = sbr.rel (0) target = $region5
    $region4: #{tpu_custom_call.1} parent=1 // pred_region
      %14 = vsyncadd [#allocation3], 0
      %s16 = sshll.u32 %s0, 4
      %s17 = int_to_ptr.hbm [resolvable:$true] %s16
      %s18 = sshll.u32 [#allocation2], 4
      %s19 = int_to_ptr.vmem [resolvable:$true] %s18
      %21 = dma.hbm_to_vmem [thread:$0]  %s17, 128, %s19, [#allocation3]
    $region5: #{tpu_custom_call.1} parent=1 // pred_fallthru
      _
    // Predicated region
    $region6: #{tpu_custom_call.1} parent=1 // pred_check
      _
    $region7: #{tpu_custom_call.1} parent=1 // pred_check_branch
      %23 = sbr.rel (0) target = $region9
    $region8: #{tpu_custom_call.1} parent=1 // pred_region
      %25 = vsyncadd [#allocation6], 0
      %s26 = sshll.u32 %s1, 4
      %s27 = int_to_ptr.hbm [resolvable:$true] %s26
      %s28 = sshll.u32 [#allocation5], 4
      %s29 = int_to_ptr.vmem [resolvable:$true] %s28
      %34 = dma.hbm_to_vmem [thread:$0]  %s27, 512, %s29, [#allocation6], 128, 128, 8
    $region9: #{tpu_custom_call.1} parent=1 // pred_fallthru
      _
    // Predicated region
    $region10: #{tpu_custom_call.1} parent=1 // pred_check
      _
    $region11: #{tpu_custom_call.1} parent=1 // pred_check_branch
      %36 = sbr.rel (0) target = $region13
    $region12: #{tpu_custom_call.1} parent=1 // pred_region
      _
    $region13: #{tpu_custom_call.1} parent=1 // pred_fallthru
      _
    // Predicated region
    $region14: #{tpu_custom_call.1} parent=1 // pred_check
      _
    $region15: #{tpu_custom_call.1} parent=1 // pred_check_branch
      %38 = sbr.rel (0) target = $region17
    $region16: #{tpu_custom_call.1} parent=1 // pred_region
      %40 = dma.done [#allocation3], 128
    $region17: #{tpu_custom_call.1} parent=1 // pred_fallthru
      _
    // Predicated region
    $region18: #{tpu_custom_call.1} parent=1 // pred_check
      _
    $region19: #{tpu_custom_call.1} parent=1 // pred_check_branch
      %42 = sbr.rel (0) target = $region21
    $region20: #{tpu_custom_call.1} parent=1 // pred_region
      %44 = dma.done [#allocation6], 512
    $region21: #{tpu_custom_call.1} parent=1 // pred_fallthru
      _
    %v45 = vld [vmem:[#allocation2] sm:$0xff]
    %v46 = vld [vmem:[#allocation5] sm:$0xff]
    %v47 = vld [vmem:[#allocation5 + $0x8] sm:$0xff]
    %v48 = vld [vmem:[#allocation5 + $0x10] sm:$0xff]
    %v49 = vld [vmem:[#allocation5 + $0x18] sm:$0xff]
    %v50 = vld [vmem:[%s2] sm:$0x1]
    %v52 = vperm.slane %v50, 0
    %vm54 = vcmask 261120
    %v56 = vsel %vm54, %v45, 0
    %58 = vmatpush.msra.mxu0 0.0
    %59 = vmatpush.msra.mxu0 0.0
    %60 = vmatpush.msra.mxu0 0.0
    %61 = vmatpush.msra.mxu0 0.0
    %62 = vmatpush.msra.mxu0 0.0
    %63 = vmatpush.msra.mxu0 0.0
    %64 = vmatpush.msra.mxu0 0.0
    %65 = vmatpush.msra.mxu0 0.0
    %66 = vmatpush.msra.mxu0 0.0
    %67 = vmatpush.msra.mxu0 0.0
    %68 = vmatpush.msra.mxu0 0.0
    %69 = vmatpush.msra.mxu0 0.0
    %70 = vmatpush.msra.mxu0 %v49
    %71 = vmatpush.msra.mxu0 %v48
    %72 = vmatpush.msra.mxu0 %v47
    %73 = vmatpush.msra.mxu0 %v46
    %74 = vmatmul.f32.gmra.mxu0 %v56
    %v75 = vpop.f32.mrf.mxu0
    %v76 = vadd.f32 %v52, %v75
    %77 = vdwg.mxu0
    %78 = vst [vmem:[#allocation7] sm:$0xff] %v76
    // Predicated region
    $region22: #{tpu_custom_call.1} parent=1 // pred_check
      _
    $region23: #{tpu_custom_call.1} parent=1 // pred_check_branch
      %80 = sbr.rel (0) target = $region25
    $region24: #{tpu_custom_call.1} parent=1 // pred_region
      %82 = vsyncadd [#allocation4], 0
      %s84 = sshll.u32 [#allocation7], 4
      %s85 = int_to_ptr.vmem [resolvable:$true] %s84
      %s86 = sshll.u32 %s3, 4
      %s87 = int_to_ptr.hbm [resolvable:$true] %s86
      %89 = dma.vmem_to_hbm [thread:$0]  %s85, 128, %s87, [#allocation4]
    $region25: #{tpu_custom_call.1} parent=1 // pred_fallthru
      _
    // Predicated region
    $region26: #{tpu_custom_call.1} parent=1 // pred_check
      _
    $region27: #{tpu_custom_call.1} parent=1 // pred_check_branch
      %91 = sbr.rel (0) target = $region29
    $region28: #{tpu_custom_call.1} parent=1 // pred_region
      %93 = dma.done [#allocation4], 128
    $region29: #{tpu_custom_call.1} parent=1 // pred_fallthru
      _
    %94 = vsyncpa [#allocation3], 1
    %95 = vsyncpa [#allocation6], 1
    %96 = vsyncpa [#allocation4], 1

</llo_original>
